<compile_context>
chip_gen: v7x
topology: tpu7x:2x2x1
jax: 0.10.0
libtpu: 0.0.40
codegen_flags: <defaults>
</compile_context>

<pallas_src>
import jax
import jax.numpy as jnp
from jax.experimental import pallas as pl
from jax.experimental.pallas import tpu as pltpu

INPUT_DIM = 784
HIDDEN_DIM = 64


def _round_up(n, m):
    return ((n + m - 1) // m) * m


def autoencoder_kernel(x_ref, w_enc_ref, b_enc_ref, w_dec_ref, b_dec_ref, out_ref):
    """One batch tile: encode -> ReLU -> decode -> sigmoid."""
    # f32 tile streamed from HBM; cast to bf16 in-kernel (free under DMA slack).
    x = x_ref[...].astype(w_enc_ref.dtype)                           # (TB, 784) bf16
    # encoder: x @ W_enc (bf16 in, f32 accumulate) + b_enc, then ReLU (f32)
    h = jnp.dot(x, w_enc_ref[...], preferred_element_type=jnp.float32)
    h = h + b_enc_ref[...]                                           # (TB, 64) f32
    h = jnp.maximum(h, 0.0)
    # decoder: h @ W_dec (bf16 in, f32 accumulate) + b_dec, then sigmoid (f32)
    y = jnp.dot(h.astype(w_dec_ref.dtype), w_dec_ref[...],
                preferred_element_type=jnp.float32)
    y = y + b_dec_ref[...]                                           # (TB, 784) f32
    out_ref[...] = jax.nn.sigmoid(y).astype(out_ref.dtype)


def prepare_params(w_enc, b_enc, w_dec, b_dec, *, compute_dtype=jnp.bfloat16):
    """One-time parameter prep: bf16 matmul weights, f32 (1, out) bias rows.

    w_enc: (input_dim, hidden_dim), w_dec: (hidden_dim, input_dim) — i.e. the
    PyTorch Linear weights already transposed to (in_features, out_features).
    """
    D, H = w_enc.shape
    assert w_dec.shape == (H, D)
    return (
        w_enc.astype(compute_dtype),
        b_enc.reshape(1, H).astype(jnp.float32),
        w_dec.astype(compute_dtype),
        b_dec.reshape(1, D).astype(jnp.float32),
    )


def autoencoder_forward(x, w_enc_c, b_enc2, w_dec_c, b_dec2,
                        *, block_batch=1024, out_dtype=jnp.bfloat16):
    """x: (B, input_dim) float32. Params as returned by prepare_params()."""
    B, D = x.shape
    H = w_enc_c.shape[1]
    assert w_enc_c.shape == (D, H)
    assert w_dec_c.shape == (H, D)
    assert b_enc2.shape == (1, H)
    assert b_dec2.shape == (1, D)

    # Batch tile: multiple of 16 (bf16 sublane packing). If the whole batch
    # would fit in one tile but B >= 32, split it so the grid has >= 2 steps
    # and both v7x TensorCores get work (no-op on v5e/v6e).
    tb = min(block_batch, _round_up(B, 16))
    if B <= tb and B >= 32:
        tb = _round_up(pl.cdiv(B, 2), 16)
    grid = (pl.cdiv(B, tb),)

    return pl.pallas_call(
        autoencoder_kernel,
        out_shape=jax.ShapeDtypeStruct((B, D), out_dtype),
        grid=grid,
        in_specs=[
            pl.BlockSpec((tb, D), lambda i: (i, 0)),   # x: f32, streamed per batch tile
            pl.BlockSpec((D, H), lambda i: (0, 0)),    # W_enc: bf16, VMEM-resident
            pl.BlockSpec((1, H), lambda i: (0, 0)),    # b_enc: f32, VMEM-resident
            pl.BlockSpec((H, D), lambda i: (0, 0)),    # W_dec: bf16, VMEM-resident
            pl.BlockSpec((1, D), lambda i: (0, 0)),    # b_dec: f32, VMEM-resident
        ],
        out_specs=pl.BlockSpec((tb, D), lambda i: (i, 0)),
        compiler_params=pltpu.CompilerParams(
            dimension_semantics=("parallel",),          # megacore shard on v7x
            vmem_limit_bytes=48 << 20,                  # fits v7x's 64 MiB VMEM
        ),
    )(x, w_enc_c, b_enc2, w_dec_c, b_dec2)


def init_params(key, input_dim, hidden_dim):
    """Deterministic PyTorch-style Linear init: U(-1/sqrt(fan_in), 1/sqrt(fan_in)).
    Weights are returned already transposed to (in_features, out_features)."""
    k1, k2, k3, k4 = jax.random.split(key, 4)
    enc_bound = 1.0 / jnp.sqrt(jnp.float32(input_dim))
    dec_bound = 1.0 / jnp.sqrt(jnp.float32(hidden_dim))
    w_enc = jax.random.uniform(k1, (input_dim, hidden_dim), jnp.float32,
                               minval=-enc_bound, maxval=enc_bound)
    b_enc = jax.random.uniform(k2, (hidden_dim,), jnp.float32,
                               minval=-enc_bound, maxval=enc_bound)
    w_dec = jax.random.uniform(k3, (hidden_dim, input_dim), jnp.float32,
                               minval=-dec_bound, maxval=dec_bound)
    b_dec = jax.random.uniform(k4, (input_dim,), jnp.float32,
                               minval=-dec_bound, maxval=dec_bound)
    return w_enc, b_enc, w_dec, b_dec


def reference_forward(x, w_enc, b_enc, w_dec, b_dec):
    h = jnp.maximum(x @ w_enc + b_enc, 0.0)
    return jax.nn.sigmoid(h @ w_dec + b_dec)


if __name__ == "__main__":
    key = jax.random.PRNGKey(0)
    kx, kp = jax.random.split(key)

    batch = 2
    x = jax.random.normal(kx, (batch, INPUT_DIM), jnp.float32)
    w_enc, b_enc, w_dec, b_dec = init_params(kp, INPUT_DIM, HIDDEN_DIM)

    # One-time parameter prep (bf16 weights, f32 bias rows).
    params = prepare_params(w_enc, b_enc, w_dec, b_dec)

    out = autoencoder_forward(x, *params)
    out = jax.block_until_ready(out)

    ref = reference_forward(x, w_enc, b_enc, w_dec, b_dec)
    assert out.shape == (batch, INPUT_DIM)
    assert out.dtype == jnp.bfloat16
    # bf16 matmul inputs + bf16 output -> relaxed tolerance vs the f32
    # reference (post-sigmoid absolute error is well under 1e-2).
    assert jnp.allclose(out.astype(jnp.float32), ref, atol=2e-2, rtol=2e-2), \
        "mismatch vs reference"

    print("KERNEL_OK")
</pallas_src>

<mosaic_0001>
module attributes {stable_mosaic.version = 11 : i64} {
  func.func @autoencoder_kernel(%arg0: i32, %arg1: memref<16x784xf32, #tpu.memory_space<vmem>>, %arg2: memref<784x64xbf16, #tpu.memory_space<vmem>>, %arg3: memref<1x64xf32, #tpu.memory_space<vmem>>, %arg4: memref<64x784xbf16, #tpu.memory_space<vmem>>, %arg5: memref<1x784xf32, #tpu.memory_space<vmem>>, %arg6: memref<16x784xbf16, #tpu.memory_space<vmem>>) attributes {dimension_semantics = [#tpu.dimension_semantics<parallel>], iteration_bounds = array<i64: 1>, scalar_prefetch = 0 : i64, scratch_operands = 0 : i64, tpu.core_type = #tpu.core_type<tc>, window_params = [{transform_indices = @transform_0, window_bounds = array<i64: 16, 784>}, {pipeline_mode = #tpu.pipeline_mode<synchronous>, transform_indices = @transform_1, window_bounds = array<i64: 784, 64>}, {pipeline_mode = #tpu.pipeline_mode<synchronous>, transform_indices = @transform_2, window_bounds = array<i64: 1, 64>}, {pipeline_mode = #tpu.pipeline_mode<synchronous>, transform_indices = @transform_3, window_bounds = array<i64: 64, 784>}, {pipeline_mode = #tpu.pipeline_mode<synchronous>, transform_indices = @transform_4, window_bounds = array<i64: 1, 784>}, {transform_indices = @transform_5, window_bounds = array<i64: 16, 784>}]} {
    %c0 = arith.constant 0 : index
    %c0_0 = arith.constant 0 : index
    %0 = vector.load %arg1[%c0, %c0_0] : memref<16x784xf32, #tpu.memory_space<vmem>>, vector<16x784xf32>
    %1 = arith.truncf %0 : vector<16x784xf32> to vector<16x784xbf16>
    %c0_1 = arith.constant 0 : index
    %c0_2 = arith.constant 0 : index
    %2 = vector.load %arg2[%c0_1, %c0_2] : memref<784x64xbf16, #tpu.memory_space<vmem>>, vector<784x64xbf16>
    %cst = arith.constant dense<0.000000e+00> : vector<16x64xf32>
    %3 = tpu.matmul %1, %2, %cst {dimension_numbers = #tpu.dot_dimension_numbers<[1], [0], [0], [1], [0, 0, 1, 1], [], []>} : vector<16x784xbf16>, vector<784x64xbf16>, vector<16x64xf32> -> vector<16x64xf32>
    %c0_3 = arith.constant 0 : index
    %c0_4 = arith.constant 0 : index
    %4 = vector.load %arg3[%c0_3, %c0_4] : memref<1x64xf32, #tpu.memory_space<vmem>>, vector<1x64xf32>
    %5 = vector.broadcast %4 : vector<1x64xf32> to vector<16x64xf32>
    %6 = arith.addf %3, %5 : vector<16x64xf32>
    %cst_5 = arith.constant 0.000000e+00 : f32
    %7 = vector.broadcast %cst_5 : f32 to vector<16x64xf32>
    %8 = arith.maximumf %6, %7 : vector<16x64xf32>
    %9 = arith.truncf %8 : vector<16x64xf32> to vector<16x64xbf16>
    %c0_6 = arith.constant 0 : index
    %c0_7 = arith.constant 0 : index
    %10 = vector.load %arg4[%c0_6, %c0_7] : memref<64x784xbf16, #tpu.memory_space<vmem>>, vector<64x784xbf16>
    %cst_8 = arith.constant dense<0.000000e+00> : vector<16x784xf32>
    %11 = tpu.matmul %9, %10, %cst_8 {dimension_numbers = #tpu.dot_dimension_numbers<[1], [0], [0], [1], [0, 0, 1, 1], [], []>} : vector<16x64xbf16>, vector<64x784xbf16>, vector<16x784xf32> -> vector<16x784xf32>
    %c0_9 = arith.constant 0 : index
    %c0_10 = arith.constant 0 : index
    %12 = vector.load %arg5[%c0_9, %c0_10] : memref<1x784xf32, #tpu.memory_space<vmem>>, vector<1x784xf32>
    %13 = vector.broadcast %12 : vector<1x784xf32> to vector<16x784xf32>
    %14 = arith.addf %11, %13 : vector<16x784xf32>
    %15 = arith.negf %14 : vector<16x784xf32>
    %16 = math.exp %15 : vector<16x784xf32>
    %cst_11 = arith.constant 1.000000e+00 : f32
    %17 = vector.broadcast %cst_11 : f32 to vector<16x784xf32>
    %18 = arith.addf %17, %16 : vector<16x784xf32>
    %19 = arith.divf %17, %18 : vector<16x784xf32>
    %20 = arith.truncf %19 : vector<16x784xf32> to vector<16x784xbf16>
    %c0_12 = arith.constant 0 : index
    %c0_13 = arith.constant 0 : index
    %21 = vector.load %arg6[%c0_12, %c0_13] : memref<16x784xbf16, #tpu.memory_space<vmem>>, vector<16x784xbf16>
    tpu.vector_store %arg6[%c0_12, %c0_13], %20 {strides = array<i32>} : memref<16x784xbf16, #tpu.memory_space<vmem>>, vector<16x784xbf16>,
    return
  }
  func.func @transform_0(%arg0: i32) -> (i32, i32) {
    %c0_i32 = arith.constant 0 : i32
    %c0_i32_0 = arith.constant 0 : i32
    return %arg0, %c0_i32 : i32, i32
  }
  func.func @transform_1(%arg0: i32) -> (i32, i32) {
    %c0_i32 = arith.constant 0 : i32
    %c0_i32_0 = arith.constant 0 : i32
    %c0_i32_1 = arith.constant 0 : i32
    return %c0_i32, %c0_i32_0 : i32, i32
  }
  func.func @transform_2(%arg0: i32) -> (i32, i32) {
    %c0_i32 = arith.constant 0 : i32
    %c0_i32_0 = arith.constant 0 : i32
    %c0_i32_1 = arith.constant 0 : i32
    return %c0_i32, %c0_i32_0 : i32, i32
  }
  func.func @transform_3(%arg0: i32) -> (i32, i32) {
    %c0_i32 = arith.constant 0 : i32
    %c0_i32_0 = arith.constant 0 : i32
    %c0_i32_1 = arith.constant 0 : i32
    return %c0_i32, %c0_i32_0 : i32, i32
  }
  func.func @transform_4(%arg0: i32) -> (i32, i32) {
    %c0_i32 = arith.constant 0 : i32
    %c0_i32_0 = arith.constant 0 : i32
    %c0_i32_1 = arith.constant 0 : i32
    return %c0_i32, %c0_i32_0 : i32, i32
  }
  func.func @transform_5(%arg0: i32) -> (i32, i32) {
    %c0_i32 = arith.constant 0 : i32
    %c0_i32_0 = arith.constant 0 : i32
    return %arg0, %c0_i32 : i32, i32
  }
}

</mosaic_0001>

<llo_original>
// kernel: tpu_custom_call.1
$region0: #{tpu_custom_call.1}
  #allocation0 [shape = 'u32[]', space=smem, size = 0x4, offset = 0x4, fixed_abs, tag = 'smem constant byte address 0x4 - core index']
  #allocation1 [shape = 'u32[144,128]{1,0:T(1,128)}', space=vmem, size = 0x12000, scoped, tag = 'internal scratch']
  %s0 = inlined_call_operand.vmem [shape: f32[2,784], index: 0, kind: input, shape index: {}]
  %s1 = inlined_call_operand.vmem [shape: bf16[784,64], index: 1, kind: input, shape index: {}]
  %s2 = inlined_call_operand.vmem [shape: f32[1,64], index: 2, kind: input, shape index: {}]
  %s3 = inlined_call_operand.vmem [shape: bf16[64,784], index: 3, kind: input, shape index: {}]
  %s4 = inlined_call_operand.vmem [shape: f32[1,784], index: 4, kind: input, shape index: {}]
  %s5 = inlined_call_operand.hbm [shape: bf16[2,784], index: 5, kind: output, shape index: {}]
  %s6 = sld [smem:[#allocation0]]
  $region30: #{tpu_custom_call.1} parent=0
    _
  %s8 = ssub.s32 1, %s6
  %s9 = scalar_select 0, %s8, %s6
  $region1: #{tpu_custom_call.1} parent=0
    #allocation2 [shape = 'u8[28672]{0}', space=vmem, size = 0x7000, scoped, tag = 'output window, operand 0, single buffered']
    #allocation3 [shape = 's32[1]{0}', space=sflag, size = 0x4, scoped, tag = 'scoped memory for tpu_custom_call.1']
    %10 = vsyncpa [#allocation3], 0
    // Predicated region
    $region2: #{tpu_custom_call.1} parent=1 // pred_check
      _
    $region3: #{tpu_custom_call.1} parent=1 // pred_check_branch
      %12 = sbr.rel (0) target = $region5
    $region4: #{tpu_custom_call.1} parent=1 // pred_region
      _
    $region5: #{tpu_custom_call.1} parent=1 // pred_fallthru
      _
    // Predicated region
    $region6: #{tpu_custom_call.1} parent=1 // pred_check
      _
    $region7: #{tpu_custom_call.1} parent=1 // pred_check_branch
      %14 = sbr.rel (0) target = $region9
    $region8: #{tpu_custom_call.1} parent=1 // pred_region
      _
    $region9: #{tpu_custom_call.1} parent=1 // pred_fallthru
      _
    // Predicated region
    $region10: #{tpu_custom_call.1} parent=1 // pred_check
      _
    $region11: #{tpu_custom_call.1} parent=1 // pred_check_branch
      %16 = sbr.rel (0) target = $region13
    $region12: #{tpu_custom_call.1} parent=1 // pred_region
      _
    $region13: #{tpu_custom_call.1} parent=1 // pred_fallthru
      _
    // Predicated region
    $region14: #{tpu_custom_call.1} parent=1 // pred_check
      _
    $region15: #{tpu_custom_call.1} parent=1 // pred_check_branch
      %18 = sbr.rel (0) target = $region17
    $region16: #{tpu_custom_call.1} parent=1 // pred_region
      _
    $region17: #{tpu_custom_call.1} parent=1 // pred_fallthru
      _
    // Predicated region
    $region18: #{tpu_custom_call.1} parent=1 // pred_check
      _
    $region19: #{tpu_custom_call.1} parent=1 // pred_check_branch
      %20 = sbr.rel (0) target = $region21
    $region20: #{tpu_custom_call.1} parent=1 // pred_region
      _
    $region21: #{tpu_custom_call.1} parent=1 // pred_fallthru
      _
    %v22 = vld [vmem:[%s0] sm:$0xff]
    %v23 = vld [vmem:[%s0 + $0x8] sm:$0x3f]
    %v24 = vld [vmem:[%s0 + $0xe] sm:$0xff]
    %v25 = vld [vmem:[%s0 + $0x16] sm:$0x3f]
    %v26 = vld [vmem:[%s0 + $0x1c] sm:$0xff]
    %v27 = vld [vmem:[%s0 + $0x24] sm:$0x3f]
    %v28 = vld [vmem:[%s0 + $0x2a] sm:$0xff]
    %v29 = vld [vmem:[%s0 + $0x32] sm:$0x3f]
    %v30 = vld [vmem:[%s0 + $0x38] sm:$0xff]
    %v31 = vld [vmem:[%s0 + $0x40] sm:$0x3f]
    %v32 = vld [vmem:[%s0 + $0x46] sm:$0xff]
    %v33 = vld [vmem:[%s0 + $0x4e] sm:$0x3f]
    %v34 = vld [vmem:[%s0 + $0x54] sm:$0xff]
    %v35 = vld [vmem:[%s0 + $0x5c] sm:$0x3f]
    %v36 = vld [vmem:[%s0 + $0x62] sm:$0xff]
    %v37 = vld [vmem:[%s0 + $0x6a] sm:$0x3f]
    %v54 = vcombine.low %v22, %v24
    %v55 = vcombine.high %v22, %v24
    %v56 = vcombine.low %v26, %v28
    %v57 = vcombine.high %v26, %v28
    %v59 = vunpack.c.l.s4 1983009808
    %v60 = vunpack.c.0.s8 %v59
    %v61 = vlaneseq
    %v62 = vshrl.u32 %v61, 7
    %v63 = vsub.s32 %v60, %v62
    %v64 = vrot.slane %v54, %v63
    %v66 = vunpack.c.l.s4 1983009808
    %v67 = vunpack.c.0.s8 %v66
    %v68 = vlaneseq
    %v69 = vshrl.u32 %v68, 7
    %v70 = vsub.s32 %v67, %v69
    %v71 = vrot.slane %v55, %v70
    %v73 = vunpack.c.l.s4 1983009808
    %v74 = vunpack.c.0.s8 %v73
    %v75 = vlaneseq
    %v76 = vshrl.u32 %v75, 7
    %v77 = vsub.s32 %v74, %v76
    %v78 = vrot.slane %v56, %v77
    %v80 = vunpack.c.l.s4 1983009808
    %v81 = vunpack.c.0.s8 %v80
    %v82 = vlaneseq
    %v83 = vshrl.u32 %v82, 7
    %v84 = vsub.s32 %v81, %v83
    %v85 = vrot.slane %v57, %v84
    %v86 = vcombine.low %v64, %v78
    %v87 = vcombine.high %v64, %v78
    %v88 = vcombine.low %v71, %v85
    %v89 = vcombine.high %v71, %v85
    %v90 = vcombine.low %v23, %v25
    %v91 = vcombine.high %v23, %v25
    %v92 = vcombine.low %v27, %v29
    %v93 = vcombine.high %v27, %v29
    %v95 = vunpack.c.l.s4 1983009808
    %v96 = vunpack.c.0.s8 %v95
    %v97 = vlaneseq
    %v98 = vshrl.u32 %v97, 7
    %v99 = vsub.s32 %v96, %v98
    %v100 = vrot.slane %v90, %v99
    %v102 = vunpack.c.l.s4 1983009808
    %v103 = vunpack.c.0.s8 %v102
    %v104 = vlaneseq
    %v105 = vshrl.u32 %v104, 7
    %v106 = vsub.s32 %v103, %v105
    %v107 = vrot.slane %v91, %v106
    %v109 = vunpack.c.l.s4 1983009808
    %v110 = vunpack.c.0.s8 %v109
    %v111 = vlaneseq
    %v112 = vshrl.u32 %v111, 7
    %v113 = vsub.s32 %v110, %v112
    %v114 = vrot.slane %v92, %v113
    %v116 = vunpack.c.l.s4 1983009808
    %v117 = vunpack.c.0.s8 %v116
    %v118 = vlaneseq
    %v119 = vshrl.u32 %v118, 7
    %v120 = vsub.s32 %v117, %v119
    %v121 = vrot.slane %v93, %v120
    %v122 = vcombine.low %v100, %v114
    %v123 = vcombine.high %v100, %v114
    %v124 = vcombine.low %v107, %v121
    %v125 = vcombine.low %v30, %v32
    %v126 = vcombine.high %v30, %v32
    %v127 = vcombine.low %v34, %v36
    %v128 = vcombine.high %v34, %v36
    %v130 = vunpack.c.l.s4 1983009808
    %v131 = vunpack.c.0.s8 %v130
    %v132 = vlaneseq
    %v133 = vshrl.u32 %v132, 7
    %v134 = vsub.s32 %v131, %v133
    %v135 = vrot.slane %v125, %v134
    %v137 = vunpack.c.l.s4 1983009808
    %v138 = vunpack.c.0.s8 %v137
    %v139 = vlaneseq
    %v140 = vshrl.u32 %v139, 7
    %v141 = vsub.s32 %v138, %v140
    %v142 = vrot.slane %v126, %v141
    %v144 = vunpack.c.l.s4 1983009808
    %v145 = vunpack.c.0.s8 %v144
    %v146 = vlaneseq
    %v147 = vshrl.u32 %v146, 7
    %v148 = vsub.s32 %v145, %v147
    %v149 = vrot.slane %v127, %v148
    %v151 = vunpack.c.l.s4 1983009808
    %v152 = vunpack.c.0.s8 %v151
    %v153 = vlaneseq
    %v154 = vshrl.u32 %v153, 7
    %v155 = vsub.s32 %v152, %v154
    %v156 = vrot.slane %v128, %v155
    %v157 = vcombine.low %v135, %v149
    %v158 = vcombine.high %v135, %v149
    %v159 = vcombine.low %v142, %v156
    %v160 = vcombine.high %v142, %v156
    %v161 = vcombine.low %v31, %v33
    %v162 = vcombine.high %v31, %v33
    %v163 = vcombine.low %v35, %v37
    %v164 = vcombine.high %v35, %v37
    %v166 = vunpack.c.l.s4 1983009808
    %v167 = vunpack.c.0.s8 %v166
    %v168 = vlaneseq
    %v169 = vshrl.u32 %v168, 7
    %v170 = vsub.s32 %v167, %v169
    %v171 = vrot.slane %v161, %v170
    %v173 = vunpack.c.l.s4 1983009808
    %v174 = vunpack.c.0.s8 %v173
    %v175 = vlaneseq
    %v176 = vshrl.u32 %v175, 7
    %v177 = vsub.s32 %v174, %v176
    %v178 = vrot.slane %v162, %v177
    %v180 = vunpack.c.l.s4 1983009808
    %v181 = vunpack.c.0.s8 %v180
    %v182 = vlaneseq
    %v183 = vshrl.u32 %v182, 7
    %v184 = vsub.s32 %v181, %v183
    %v185 = vrot.slane %v163, %v184
    %v187 = vunpack.c.l.s4 1983009808
    %v188 = vunpack.c.0.s8 %v187
    %v189 = vlaneseq
    %v190 = vshrl.u32 %v189, 7
    %v191 = vsub.s32 %v188, %v190
    %v192 = vrot.slane %v164, %v191
    %v193 = vcombine.low %v171, %v185
    %v194 = vcombine.high %v171, %v185
    %v195 = vcombine.low %v178, %v192
    %v210 = vpack.c.bf16 %v157, %v86
    %v211 = vpack.c.bf16 %v158, %v87
    %v212 = vpack.c.bf16 %v159, %v88
    %v213 = vpack.c.bf16 %v160, %v89
    %v214 = vpack.c.bf16 %v193, %v122
    %v215 = vpack.c.bf16 %v194, %v123
    %v216 = vpack.c.bf16 %v195, %v124
    %v217 = vld [vmem:[%s1] sm:$0xf]
    %v218 = vld [vmem:[%s1 + $0x4] sm:$0xf]
    %v219 = vld [vmem:[%s1 + $0x8] sm:$0xf]
    %v220 = vld [vmem:[%s1 + $0xc] sm:$0xf]
    %v221 = vld [vmem:[%s1 + $0x10] sm:$0xf]
    %v222 = vld [vmem:[%s1 + $0x14] sm:$0xf]
    %v223 = vld [vmem:[%s1 + $0x18] sm:$0xf]
    %v224 = vld [vmem:[%s1 + $0x1c] sm:$0xf]
    %v225 = vld [vmem:[%s1 + $0x20] sm:$0xf]
    %v226 = vld [vmem:[%s1 + $0x24] sm:$0xf]
    %v227 = vld [vmem:[%s1 + $0x28] sm:$0xf]
    %v228 = vld [vmem:[%s1 + $0x2c] sm:$0xf]
    %v229 = vld [vmem:[%s1 + $0x30] sm:$0xf]
    %v230 = vld [vmem:[%s1 + $0x34] sm:$0xf]
    %v231 = vld [vmem:[%s1 + $0x38] sm:$0xf]
    %v232 = vld [vmem:[%s1 + $0x3c] sm:$0xf]
    %v233 = vld [vmem:[%s1 + $0x40] sm:$0xf]
    %v234 = vld [vmem:[%s1 + $0x44] sm:$0xf]
    %v235 = vld [vmem:[%s1 + $0x48] sm:$0xf]
    %v236 = vld [vmem:[%s1 + $0x4c] sm:$0xf]
    %v237 = vld [vmem:[%s1 + $0x50] sm:$0xf]
    %v238 = vld [vmem:[%s1 + $0x54] sm:$0xf]
    %v239 = vld [vmem:[%s1 + $0x58] sm:$0xf]
    %v240 = vld [vmem:[%s1 + $0x5c] sm:$0xf]
    %v241 = vld [vmem:[%s1 + $0x60] sm:$0xf]
    %v242 = vld [vmem:[%s1 + $0x64] sm:$0xf]
    %v243 = vld [vmem:[%s1 + $0x68] sm:$0xf]
    %v244 = vld [vmem:[%s1 + $0x6c] sm:$0xf]
    %v245 = vld [vmem:[%s1 + $0x70] sm:$0xf]
    %v246 = vld [vmem:[%s1 + $0x74] sm:$0xf]
    %v247 = vld [vmem:[%s1 + $0x78] sm:$0xf]
    %v248 = vld [vmem:[%s1 + $0x7c] sm:$0xf]
    %v249 = vld [vmem:[%s1 + $0x80] sm:$0xf]
    %v250 = vld [vmem:[%s1 + $0x84] sm:$0xf]
    %v251 = vld [vmem:[%s1 + $0x88] sm:$0xf]
    %v252 = vld [vmem:[%s1 + $0x8c] sm:$0xf]
    %v253 = vld [vmem:[%s1 + $0x90] sm:$0xf]
    %v254 = vld [vmem:[%s1 + $0x94] sm:$0xf]
    %v255 = vld [vmem:[%s1 + $0x98] sm:$0xf]
    %v256 = vld [vmem:[%s1 + $0x9c] sm:$0xf]
    %v257 = vld [vmem:[%s1 + $0xa0] sm:$0xf]
    %v258 = vld [vmem:[%s1 + $0xa4] sm:$0xf]
    %v259 = vld [vmem:[%s1 + $0xa8] sm:$0xf]
    %v260 = vld [vmem:[%s1 + $0xac] sm:$0xf]
    %v261 = vld [vmem:[%s1 + $0xb0] sm:$0xf]
    %v262 = vld [vmem:[%s1 + $0xb4] sm:$0xf]
    %v263 = vld [vmem:[%s1 + $0xb8] sm:$0xf]
    %v264 = vld [vmem:[%s1 + $0xbc] sm:$0xf]
    %v265 = vld [vmem:[%s1 + $0xc0] sm:$0xf]
    %v266 = vld [vmem:[%s1 + $0xc4] sm:$0xf]
    %v267 = vld [vmem:[%s1 + $0xc8] sm:$0xf]
    %v268 = vld [vmem:[%s1 + $0xcc] sm:$0xf]
    %v269 = vld [vmem:[%s1 + $0xd0] sm:$0xf]
    %v270 = vld [vmem:[%s1 + $0xd4] sm:$0xf]
    %v271 = vld [vmem:[%s1 + $0xd8] sm:$0xf]
    %v272 = vld [vmem:[%s1 + $0xdc] sm:$0xf]
    %v273 = vld [vmem:[%s1 + $0xe0] sm:$0xf]
    %v274 = vld [vmem:[%s1 + $0xe4] sm:$0xf]
    %v275 = vld [vmem:[%s1 + $0xe8] sm:$0xf]
    %v276 = vld [vmem:[%s1 + $0xec] sm:$0xf]
    %v277 = vld [vmem:[%s1 + $0xf0] sm:$0xf]
    %v278 = vld [vmem:[%s1 + $0xf4] sm:$0xf]
    %v279 = vld [vmem:[%s1 + $0xf8] sm:$0xf]
    %v280 = vld [vmem:[%s1 + $0xfc] sm:$0xf]
    %v281 = vld [vmem:[%s1 + $0x100] sm:$0xf]
    %v282 = vld [vmem:[%s1 + $0x104] sm:$0xf]
    %v283 = vld [vmem:[%s1 + $0x108] sm:$0xf]
    %v284 = vld [vmem:[%s1 + $0x10c] sm:$0xf]
    %v285 = vld [vmem:[%s1 + $0x110] sm:$0xf]
    %v286 = vld [vmem:[%s1 + $0x114] sm:$0xf]
    %v287 = vld [vmem:[%s1 + $0x118] sm:$0xf]
    %v288 = vld [vmem:[%s1 + $0x11c] sm:$0xf]
    %v289 = vld [vmem:[%s1 + $0x120] sm:$0xf]
    %v290 = vld [vmem:[%s1 + $0x124] sm:$0xf]
    %v291 = vld [vmem:[%s1 + $0x128] sm:$0xf]
    %v292 = vld [vmem:[%s1 + $0x12c] sm:$0xf]
    %v293 = vld [vmem:[%s1 + $0x130] sm:$0xf]
    %v294 = vld [vmem:[%s1 + $0x134] sm:$0xf]
    %v295 = vld [vmem:[%s1 + $0x138] sm:$0xf]
    %v296 = vld [vmem:[%s1 + $0x13c] sm:$0xf]
    %v297 = vld [vmem:[%s1 + $0x140] sm:$0xf]
    %v298 = vld [vmem:[%s1 + $0x144] sm:$0xf]
    %v299 = vld [vmem:[%s1 + $0x148] sm:$0xf]
    %v300 = vld [vmem:[%s1 + $0x14c] sm:$0xf]
    %v301 = vld [vmem:[%s1 + $0x150] sm:$0xf]
    %v302 = vld [vmem:[%s1 + $0x154] sm:$0xf]
    %v303 = vld [vmem:[%s1 + $0x158] sm:$0xf]
    %v304 = vld [vmem:[%s1 + $0x15c] sm:$0xf]
    %v305 = vld [vmem:[%s1 + $0x160] sm:$0xf]
    %v306 = vld [vmem:[%s1 + $0x164] sm:$0xf]
    %v307 = vld [vmem:[%s1 + $0x168] sm:$0xf]
    %v308 = vld [vmem:[%s1 + $0x16c] sm:$0xf]
    %v309 = vld [vmem:[%s1 + $0x170] sm:$0xf]
    %v310 = vld [vmem:[%s1 + $0x174] sm:$0xf]
    %v311 = vld [vmem:[%s1 + $0x178] sm:$0xf]
    %v312 = vld [vmem:[%s1 + $0x17c] sm:$0xf]
    %v313 = vld [vmem:[%s1 + $0x180] sm:$0xf]
    %v314 = vld [vmem:[%s1 + $0x184] sm:$0xf]
    %v315 = vld [vmem:[%s2] sm:$0x1]
    %v317 = vlaneseq
    %v318 = vshrl.u32 %v317, 7
    %v319 = vsub.s32 0, %v318
    %v320 = vrot.slane %v315, %v319
    %v420 = vunpack.c.l.b16 %v217
    %v421 = vunpack.c.l.b16 %v218
    %v422 = vunpack.c.l.b16 %v219
    %v423 = vunpack.c.l.b16 %v220
    %v424 = vunpack.c.l.b16 %v221
    %v425 = vunpack.c.l.b16 %v222
    %v426 = vunpack.c.l.b16 %v223
    %v427 = vunpack.c.l.b16 %v224
    %v428 = vunpack.c.l.b16 %v225
    %v429 = vunpack.c.l.b16 %v226
    %v430 = vunpack.c.l.b16 %v227
    %v431 = vunpack.c.l.b16 %v228
    %v432 = vunpack.c.l.b16 %v229
    %v433 = vunpack.c.l.b16 %v230
    %v434 = vunpack.c.l.b16 %v231
    %v435 = vunpack.c.l.b16 %v232
    %v436 = vunpack.c.l.b16 %v233
    %v437 = vunpack.c.l.b16 %v234
    %v438 = vunpack.c.l.b16 %v235
    %v439 = vunpack.c.l.b16 %v236
    %v440 = vunpack.c.l.b16 %v237
    %v441 = vunpack.c.l.b16 %v238
    %v442 = vunpack.c.l.b16 %v239
    %v443 = vunpack.c.l.b16 %v240
    %v444 = vunpack.c.l.b16 %v241
    %v445 = vunpack.c.l.b16 %v242
    %v446 = vunpack.c.l.b16 %v243
    %v447 = vunpack.c.l.b16 %v244
    %v448 = vunpack.c.l.b16 %v245
    %v449 = vunpack.c.l.b16 %v246
    %v450 = vunpack.c.l.b16 %v247
    %v451 = vunpack.c.l.b16 %v248
    %v452 = vunpack.c.l.b16 %v249
    %v453 = vunpack.c.l.b16 %v250
    %v454 = vunpack.c.l.b16 %v251
    %v455 = vunpack.c.l.b16 %v252
    %v456 = vunpack.c.l.b16 %v253
    %v457 = vunpack.c.l.b16 %v254
    %v458 = vunpack.c.l.b16 %v255
    %v459 = vunpack.c.l.b16 %v256
    %v460 = vunpack.c.l.b16 %v257
    %v461 = vunpack.c.l.b16 %v258
    %v462 = vunpack.c.l.b16 %v259
    %v463 = vunpack.c.l.b16 %v260
    %v464 = vunpack.c.l.b16 %v261
    %v465 = vunpack.c.l.b16 %v262
    %v466 = vunpack.c.l.b16 %v263
    %v467 = vunpack.c.l.b16 %v264
    %v468 = vunpack.c.l.b16 %v265
    %v469 = vunpack.c.l.b16 %v266
    %v470 = vunpack.c.l.b16 %v267
    %v471 = vunpack.c.l.b16 %v268
    %v472 = vunpack.c.l.b16 %v269
    %v473 = vunpack.c.l.b16 %v270
    %v474 = vunpack.c.l.b16 %v271
    %v475 = vunpack.c.l.b16 %v272
    %v476 = vunpack.c.l.b16 %v273
    %v477 = vunpack.c.l.b16 %v274
    %v478 = vunpack.c.l.b16 %v275
    %v479 = vunpack.c.l.b16 %v276
    %v480 = vunpack.c.l.b16 %v277
    %v481 = vunpack.c.l.b16 %v278
    %v482 = vunpack.c.l.b16 %v279
    %v483 = vunpack.c.l.b16 %v280
    %v484 = vunpack.c.l.b16 %v281
    %v485 = vunpack.c.l.b16 %v282
    %v486 = vunpack.c.l.b16 %v283
    %v487 = vunpack.c.l.b16 %v284
    %v488 = vunpack.c.l.b16 %v285
    %v489 = vunpack.c.l.b16 %v286
    %v490 = vunpack.c.l.b16 %v287
    %v491 = vunpack.c.l.b16 %v288
    %v492 = vunpack.c.l.b16 %v289
    %v493 = vunpack.c.l.b16 %v290
    %v494 = vunpack.c.l.b16 %v291
    %v495 = vunpack.c.l.b16 %v292
    %v496 = vunpack.c.l.b16 %v293
    %v497 = vunpack.c.l.b16 %v294
    %v498 = vunpack.c.l.b16 %v295
    %v499 = vunpack.c.l.b16 %v296
    %v500 = vunpack.c.l.b16 %v297
    %v501 = vunpack.c.l.b16 %v298
    %v502 = vunpack.c.l.b16 %v299
    %v503 = vunpack.c.l.b16 %v300
    %v504 = vunpack.c.l.b16 %v301
    %v505 = vunpack.c.l.b16 %v302
    %v506 = vunpack.c.l.b16 %v303
    %v507 = vunpack.c.l.b16 %v304
    %v508 = vunpack.c.l.b16 %v305
    %v509 = vunpack.c.l.b16 %v306
    %v510 = vunpack.c.l.b16 %v307
    %v511 = vunpack.c.l.b16 %v308
    %v512 = vunpack.c.l.b16 %v309
    %v513 = vunpack.c.l.b16 %v310
    %v514 = vunpack.c.l.b16 %v311
    %v515 = vunpack.c.l.b16 %v312
    %v516 = vunpack.c.l.b16 %v313
    %v517 = vunpack.c.l.b16 %v314
    %v518 = vpack.c.b16 %v421, %v420
    %v519 = vpack.c.b16 %v423, %v422
    %v520 = vpack.c.b16 %v425, %v424
    %v521 = vpack.c.b16 %v427, %v426
    %v522 = vpack.c.b16 %v429, %v428
    %v523 = vpack.c.b16 %v431, %v430
    %v524 = vpack.c.b16 %v433, %v432
    %v525 = vpack.c.b16 %v435, %v434
    %v526 = vpack.c.b16 %v437, %v436
    %v527 = vpack.c.b16 %v439, %v438
    %v528 = vpack.c.b16 %v441, %v440
    %v529 = vpack.c.b16 %v443, %v442
    %v530 = vpack.c.b16 %v445, %v444
    %v531 = vpack.c.b16 %v447, %v446
    %v532 = vpack.c.b16 %v449, %v448
    %v533 = vpack.c.b16 %v451, %v450
    %v534 = vpack.c.b16 %v453, %v452
    %v535 = vpack.c.b16 %v455, %v454
    %v536 = vpack.c.b16 %v457, %v456
    %v537 = vpack.c.b16 %v459, %v458
    %v538 = vpack.c.b16 %v461, %v460
    %v539 = vpack.c.b16 %v463, %v462
    %v540 = vpack.c.b16 %v465, %v464
    %v541 = vpack.c.b16 %v467, %v466
    %v542 = vpack.c.b16 %v469, %v468
    %v543 = vpack.c.b16 %v471, %v470
    %v544 = vpack.c.b16 %v473, %v472
    %v545 = vpack.c.b16 %v475, %v474
    %v546 = vpack.c.b16 %v477, %v476
    %v547 = vpack.c.b16 %v479, %v478
    %v548 = vpack.c.b16 %v481, %v480
    %v549 = vpack.c.b16 %v483, %v482
    %v550 = vpack.c.b16 %v485, %v484
    %v551 = vpack.c.b16 %v487, %v486
    %v552 = vpack.c.b16 %v489, %v488
    %v553 = vpack.c.b16 %v491, %v490
    %v554 = vpack.c.b16 %v493, %v492
    %v555 = vpack.c.b16 %v495, %v494
    %v556 = vpack.c.b16 %v497, %v496
    %v557 = vpack.c.b16 %v499, %v498
    %v558 = vpack.c.b16 %v501, %v500
    %v559 = vpack.c.b16 %v503, %v502
    %v560 = vpack.c.b16 %v505, %v504
    %v561 = vpack.c.b16 %v507, %v506
    %v562 = vpack.c.b16 %v509, %v508
    %v563 = vpack.c.b16 %v511, %v510
    %v564 = vpack.c.b16 %v513, %v512
    %v565 = vpack.c.b16 %v515, %v514
    %v566 = vpack.c.b16 %v517, %v516
    %vm616 = vcmask 130048
    %v618 = vsel %vm616, %v216, 0
    %620 = vmatprep.subr.bf16.mxu0 0
    %621 = vmatpush1.bf16.msra.mxu0 %v518
    %622 = vmatprep.subr.bf16.mxu0 0
    %623 = vmatpush1.bf16.msra.mxu0 %v519
    %624 = vmatprep.subr.bf16.mxu0 0
    %625 = vmatpush1.bf16.msra.mxu0 %v520
    %626 = vmatprep.subr.bf16.mxu0 0
    %627 = vmatpush1.bf16.msra.mxu0 %v521
    %628 = vmatprep.subr.bf16.mxu0 0
    %629 = vmatpush1.bf16.msra.mxu0 %v522
    %630 = vmatprep.subr.bf16.mxu0 0
    %631 = vmatpush1.bf16.msra.mxu0 %v523
    %632 = vmatprep.subr.bf16.mxu0 0
    %633 = vmatpush1.bf16.msra.mxu0 %v524
    %634 = vmatprep.subr.bf16.mxu0 0
    %635 = vmatpush1.bf16.msra.mxu0 %v525
    %636 = vmatprep.subr.bf16.mxu0 0
    %637 = vmatpush1.bf16.msra.mxu0 %v526
    %638 = vmatprep.subr.bf16.mxu0 0
    %639 = vmatpush1.bf16.msra.mxu0 %v527
    %640 = vmatprep.subr.bf16.mxu0 0
    %641 = vmatpush1.bf16.msra.mxu0 %v528
    %642 = vmatprep.subr.bf16.mxu0 0
    %643 = vmatpush1.bf16.msra.mxu0 %v529
    %644 = vmatprep.subr.bf16.mxu0 0
    %645 = vmatpush1.bf16.msra.mxu0 %v530
    %646 = vmatprep.subr.bf16.mxu0 0
    %647 = vmatpush1.bf16.msra.mxu0 %v531
    %648 = vmatprep.subr.bf16.mxu0 0
    %649 = vmatpush1.bf16.msra.mxu0 %v532
    %650 = vmatprep.subr.bf16.mxu0 0
    %651 = vmatpush1.bf16.msra.mxu0 %v533
    %652 = vmatprep.mubr.bf16.mxu0 %v211
    %653 = vmatmul.mubr.bf16.gmra.mrb[0].mxu0 %v210
    %v654 = vpop.f32.mrb[0].mxu0
    %v655 = vadd.f32 %v320, %v654
    %v656 = vpop.f32.mrb[0].mxu0
    %v657 = vpop.f32.mrb[0].mxu0
    %v658 = vadd.f32 %v320, %v657
    %v659 = vpop.f32.mrb[0].mxu0
    %660 = vdwg.mxu0
    %661 = vmatprep.subr.bf16.mxu0 0
    %662 = vmatpush1.bf16.msra.mxu0 %v534
    %663 = vmatprep.subr.bf16.mxu0 0
    %664 = vmatpush1.bf16.msra.mxu0 %v535
    %665 = vmatprep.subr.bf16.mxu0 0
    %666 = vmatpush1.bf16.msra.mxu0 %v536
    %667 = vmatprep.subr.bf16.mxu0 0
    %668 = vmatpush1.bf16.msra.mxu0 %v537
    %669 = vmatprep.subr.bf16.mxu0 0
    %670 = vmatpush1.bf16.msra.mxu0 %v538
    %671 = vmatprep.subr.bf16.mxu0 0
    %672 = vmatpush1.bf16.msra.mxu0 %v539
    %673 = vmatprep.subr.bf16.mxu0 0
    %674 = vmatpush1.bf16.msra.mxu0 %v540
    %675 = vmatprep.subr.bf16.mxu0 0
    %676 = vmatpush1.bf16.msra.mxu0 %v541
    %677 = vmatprep.subr.bf16.mxu0 0
    %678 = vmatpush1.bf16.msra.mxu0 %v542
    %679 = vmatprep.subr.bf16.mxu0 0
    %680 = vmatpush1.bf16.msra.mxu0 %v543
    %681 = vmatprep.subr.bf16.mxu0 0
    %682 = vmatpush1.bf16.msra.mxu0 %v544
    %683 = vmatprep.subr.bf16.mxu0 0
    %684 = vmatpush1.bf16.msra.mxu0 %v545
    %685 = vmatprep.subr.bf16.mxu0 0
    %686 = vmatpush1.bf16.msra.mxu0 %v546
    %687 = vmatprep.subr.bf16.mxu0 0
    %688 = vmatpush1.bf16.msra.mxu0 %v547
    %689 = vmatprep.subr.bf16.mxu0 0
    %690 = vmatpush1.bf16.msra.mxu0 %v548
    %691 = vmatprep.subr.bf16.mxu0 0
    %692 = vmatpush1.bf16.msra.mxu0 %v549
    %693 = vmatprep.mubr.bf16.mxu0 %v213
    %694 = vmatmul.mubr.bf16.gmra.mrb[0].mxu0 %v212
    %v695 = vpop.f32.mrb[0].mxu0
    %v696 = vadd.f32 %v655, %v695
    %v697 = vpop.f32.mrb[0].mxu0
    %v698 = vpop.f32.mrb[0].mxu0
    %v699 = vadd.f32 %v658, %v698
    %v700 = vpop.f32.mrb[0].mxu0
    %701 = vdwg.mxu0
    %702 = vmatprep.subr.bf16.mxu0 0
    %703 = vmatpush1.bf16.msra.mxu0 %v550
    %704 = vmatprep.subr.bf16.mxu0 0
    %705 = vmatpush1.bf16.msra.mxu0 %v551
    %706 = vmatprep.subr.bf16.mxu0 0
    %707 = vmatpush1.bf16.msra.mxu0 %v552
    %708 = vmatprep.subr.bf16.mxu0 0
    %709 = vmatpush1.bf16.msra.mxu0 %v553
    %710 = vmatprep.subr.bf16.mxu0 0
    %711 = vmatpush1.bf16.msra.mxu0 %v554
    %712 = vmatprep.subr.bf16.mxu0 0
    %713 = vmatpush1.bf16.msra.mxu0 %v555
    %714 = vmatprep.subr.bf16.mxu0 0
    %715 = vmatpush1.bf16.msra.mxu0 %v556
    %716 = vmatprep.subr.bf16.mxu0 0
    %717 = vmatpush1.bf16.msra.mxu0 %v557
    %718 = vmatprep.subr.bf16.mxu0 0
    %719 = vmatpush1.bf16.msra.mxu0 %v558
    %720 = vmatprep.subr.bf16.mxu0 0
    %721 = vmatpush1.bf16.msra.mxu0 %v559
    %722 = vmatprep.subr.bf16.mxu0 0
    %723 = vmatpush1.bf16.msra.mxu0 %v560
    %724 = vmatprep.subr.bf16.mxu0 0
    %725 = vmatpush1.bf16.msra.mxu0 %v561
    %726 = vmatprep.subr.bf16.mxu0 0
    %727 = vmatpush1.bf16.msra.mxu0 %v562
    %728 = vmatprep.subr.bf16.mxu0 0
    %729 = vmatpush1.bf16.msra.mxu0 %v563
    %730 = vmatprep.subr.bf16.mxu0 0
    %731 = vmatpush1.bf16.msra.mxu0 %v564
    %732 = vmatprep.subr.bf16.mxu0 0
    %733 = vmatpush1.bf16.msra.mxu0 %v565
    %734 = vmatprep.mubr.bf16.mxu0 %v215
    %735 = vmatmul.mubr.bf16.gmra.mrb[0].mxu0 %v214
    %v736 = vpop.f32.mrb[0].mxu0
    %v737 = vadd.f32 %v696, %v736
    %v738 = vpop.f32.mrb[0].mxu0
    %v739 = vpop.f32.mrb[0].mxu0
    %v740 = vadd.f32 %v699, %v739
    %v741 = vpop.f32.mrb[0].mxu0
    %742 = vdwg.mxu0
    %743 = vmatprep.subr.bf16.mxu0 0
    %744 = vmatpush1.bf16.msra.mxu0 %v566
    %745 = vmatprep.subr.bf16.mxu0 0
    %746 = vmatpush1.bf16.msra.mxu0 0
    %747 = vmatprep.subr.bf16.mxu0 0
    %748 = vmatpush1.bf16.msra.mxu0 0
    %749 = vmatprep.subr.bf16.mxu0 0
    %750 = vmatpush1.bf16.msra.mxu0 0
    %751 = vmatprep.subr.bf16.mxu0 0
    %752 = vmatpush1.bf16.msra.mxu0 0
    %753 = vmatprep.subr.bf16.mxu0 0
    %754 = vmatpush1.bf16.msra.mxu0 0
    %755 = vmatprep.subr.bf16.mxu0 0
    %756 = vmatpush1.bf16.msra.mxu0 0
    %757 = vmatprep.subr.bf16.mxu0 0
    %758 = vmatpush1.bf16.msra.mxu0 0
    %759 = vmatprep.subr.bf16.mxu0 0
    %760 = vmatpush1.bf16.msra.mxu0 0
    %761 = vmatprep.subr.bf16.mxu0 0
    %762 = vmatpush1.bf16.msra.mxu0 0
    %763 = vmatprep.subr.bf16.mxu0 0
    %764 = vmatpush1.bf16.msra.mxu0 0
    %765 = vmatprep.subr.bf16.mxu0 0
    %766 = vmatpush1.bf16.msra.mxu0 0
    %767 = vmatprep.subr.bf16.mxu0 0
    %768 = vmatpush1.bf16.msra.mxu0 0
    %769 = vmatprep.subr.bf16.mxu0 0
    %770 = vmatpush1.bf16.msra.mxu0 0
    %771 = vmatprep.subr.bf16.mxu0 0
    %772 = vmatpush1.bf16.msra.mxu0 0
    %773 = vmatprep.subr.bf16.mxu0 0
    %774 = vmatpush1.bf16.msra.mxu0 0
    %775 = vmatprep.mubr.bf16.mxu0 0
    %776 = vmatmul.mubr.bf16.gmra.mrb[0].mxu0 %v618
    %v777 = vpop.f32.mrb[0].mxu0
    %v778 = vadd.f32 %v737, %v777
    %v779 = vpop.f32.mrb[0].mxu0
    %v780 = vpop.f32.mrb[0].mxu0
    %v781 = vadd.f32 %v740, %v780
    %v782 = vpop.f32.mrb[0].mxu0
    %783 = vdwg.mxu0
    %v784 = vmax.f32 %v778, 0.0
    %v785 = vmax.f32 %v781, 0.0
    %v786 = vpack.c.bf16 %v785, %v784
    %v787 = vld [vmem:[%s3] sm:$0xff]
    %v788 = vld [vmem:[%s3 + $0x8] sm:$0xff]
    %v789 = vld [vmem:[%s3 + $0x10] sm:$0xff]
    %v790 = vld [vmem:[%s3 + $0x18] sm:$0xf]
    %v791 = vld [vmem:[%s3 + $0x1c] sm:$0xff]
    %v792 = vld [vmem:[%s3 + $0x24] sm:$0xff]
    %v793 = vld [vmem:[%s3 + $0x2c] sm:$0xff]
    %v794 = vld [vmem:[%s3 + $0x34] sm:$0xf]
    %v795 = vld [vmem:[%s3 + $0x38] sm:$0xff]
    %v796 = vld [vmem:[%s3 + $0x40] sm:$0xff]
    %v797 = vld [vmem:[%s3 + $0x48] sm:$0xff]
    %v798 = vld [vmem:[%s3 + $0x50] sm:$0xf]
    %v799 = vld [vmem:[%s3 + $0x54] sm:$0xff]
    %v800 = vld [vmem:[%s3 + $0x5c] sm:$0xff]
    %v801 = vld [vmem:[%s3 + $0x64] sm:$0xff]
    %v802 = vld [vmem:[%s3 + $0x6c] sm:$0xf]
    %v803 = vld [vmem:[%s3 + $0x70] sm:$0xff]
    %v804 = vld [vmem:[%s3 + $0x78] sm:$0xff]
    %v805 = vld [vmem:[%s3 + $0x80] sm:$0xff]
    %v806 = vld [vmem:[%s3 + $0x88] sm:$0xf]
    %v807 = vld [vmem:[%s3 + $0x8c] sm:$0xff]
    %v808 = vld [vmem:[%s3 + $0x94] sm:$0xff]
    %v809 = vld [vmem:[%s3 + $0x9c] sm:$0xff]
    %v810 = vld [vmem:[%s3 + $0xa4] sm:$0xf]
    %v811 = vld [vmem:[%s3 + $0xa8] sm:$0xff]
    %v812 = vld [vmem:[%s3 + $0xb0] sm:$0xff]
    %v813 = vld [vmem:[%s3 + $0xb8] sm:$0xff]
    %v814 = vld [vmem:[%s3 + $0xc0] sm:$0xf]
    %v815 = vld [vmem:[%s3 + $0xc4] sm:$0xff]
    %v816 = vld [vmem:[%s3 + $0xcc] sm:$0xff]
    %v817 = vld [vmem:[%s3 + $0xd4] sm:$0xff]
    %v818 = vld [vmem:[%s3 + $0xdc] sm:$0xf]
    %v819 = vld [vmem:[%s4] sm:$0x7f]
    %v821 = vlaneseq
    %v822 = vshrl.u32 %v821, 7
    %v823 = vsub.s32 0, %v822
    %v824 = vrot.slane %v819, %v823
    %v825 = vlaneseq
    %v826 = vshrl.u32 %v825, 7
    %v827 = vsub.s32 1, %v826
    %v828 = vrot.slane %v819, %v827
    %v829 = vlaneseq
    %v830 = vshrl.u32 %v829, 7
    %v831 = vsub.s32 2, %v830
    %v832 = vrot.slane %v819, %v831
    %v833 = vlaneseq
    %v834 = vshrl.u32 %v833, 7
    %v835 = vsub.s32 3, %v834
    %v836 = vrot.slane %v819, %v835
    %v837 = vlaneseq
    %v838 = vshrl.u32 %v837, 7
    %v839 = vsub.s32 4, %v838
    %v840 = vrot.slane %v819, %v839
    %v841 = vlaneseq
    %v842 = vshrl.u32 %v841, 7
    %v843 = vsub.s32 5, %v842
    %v844 = vrot.slane %v819, %v843
    %v845 = vlaneseq
    %v846 = vshrl.u32 %v845, 7
    %v847 = vsub.s32 6, %v846
    %v848 = vrot.slane %v819, %v847
    %v888 = vunpack.c.l.b16 %v787
    %v889 = vunpack.c.h.b16 %v787
    %v890 = vunpack.c.l.b16 %v788
    %v891 = vunpack.c.h.b16 %v788
    %v892 = vunpack.c.l.b16 %v789
    %v893 = vunpack.c.h.b16 %v789
    %v894 = vunpack.c.l.b16 %v790
    %v895 = vunpack.c.l.b16 %v791
    %v896 = vunpack.c.h.b16 %v791
    %v897 = vunpack.c.l.b16 %v792
    %v898 = vunpack.c.h.b16 %v792
    %v899 = vunpack.c.l.b16 %v793
    %v900 = vunpack.c.h.b16 %v793
    %v901 = vunpack.c.l.b16 %v794
    %v902 = vunpack.c.l.b16 %v795
    %v903 = vunpack.c.h.b16 %v795
    %v904 = vunpack.c.l.b16 %v796
    %v905 = vunpack.c.h.b16 %v796
    %v906 = vunpack.c.l.b16 %v797
    %v907 = vunpack.c.h.b16 %v797
    %v908 = vunpack.c.l.b16 %v798
    %v909 = vunpack.c.l.b16 %v799
    %v910 = vunpack.c.h.b16 %v799
    %v911 = vunpack.c.l.b16 %v800
    %v912 = vunpack.c.h.b16 %v800
    %v913 = vunpack.c.l.b16 %v801
    %v914 = vunpack.c.h.b16 %v801
    %v915 = vunpack.c.l.b16 %v802
    %v916 = vunpack.c.l.b16 %v803
    %v917 = vunpack.c.h.b16 %v803
    %v918 = vunpack.c.l.b16 %v804
    %v919 = vunpack.c.h.b16 %v804
    %v920 = vunpack.c.l.b16 %v805
    %v921 = vunpack.c.h.b16 %v805
    %v922 = vunpack.c.l.b16 %v806
    %v923 = vunpack.c.l.b16 %v807
    %v924 = vunpack.c.h.b16 %v807
    %v925 = vunpack.c.l.b16 %v808
    %v926 = vunpack.c.h.b16 %v808
    %v927 = vunpack.c.l.b16 %v809
    %v928 = vunpack.c.h.b16 %v809
    %v929 = vunpack.c.l.b16 %v810
    %v930 = vunpack.c.l.b16 %v811
    %v931 = vunpack.c.h.b16 %v811
    %v932 = vunpack.c.l.b16 %v812
    %v933 = vunpack.c.h.b16 %v812
    %v934 = vunpack.c.l.b16 %v813
    %v935 = vunpack.c.h.b16 %v813
    %v936 = vunpack.c.l.b16 %v814
    %v937 = vunpack.c.l.b16 %v815
    %v938 = vunpack.c.h.b16 %v815
    %v939 = vunpack.c.l.b16 %v816
    %v940 = vunpack.c.h.b16 %v816
    %v941 = vunpack.c.l.b16 %v817
    %v942 = vunpack.c.h.b16 %v817
    %v943 = vunpack.c.l.b16 %v818
    %v944 = vpack.c.b16 %v895, %v888
    %v945 = vpack.c.b16 %v896, %v889
    %v946 = vpack.c.b16 %v897, %v890
    %v947 = vpack.c.b16 %v898, %v891
    %v948 = vpack.c.b16 %v899, %v892
    %v949 = vpack.c.b16 %v900, %v893
    %v950 = vpack.c.b16 %v901, %v894
    %v951 = vpack.c.b16 %v909, %v902
    %v952 = vpack.c.b16 %v910, %v903
    %v953 = vpack.c.b16 %v911, %v904
    %v954 = vpack.c.b16 %v912, %v905
    %v955 = vpack.c.b16 %v913, %v906
    %v956 = vpack.c.b16 %v914, %v907
    %v957 = vpack.c.b16 %v915, %v908
    %v958 = vpack.c.b16 %v923, %v916
    %v959 = vpack.c.b16 %v924, %v917
    %v960 = vpack.c.b16 %v925, %v918
    %v961 = vpack.c.b16 %v926, %v919
    %v962 = vpack.c.b16 %v927, %v920
    %v963 = vpack.c.b16 %v928, %v921
    %v964 = vpack.c.b16 %v929, %v922
    %v965 = vpack.c.b16 %v937, %v930
    %v966 = vpack.c.b16 %v938, %v931
    %v967 = vpack.c.b16 %v939, %v932
    %v968 = vpack.c.b16 %v940, %v933
    %v969 = vpack.c.b16 %v941, %v934
    %v970 = vpack.c.b16 %v942, %v935
    %v971 = vpack.c.b16 %v943, %v936
    %vm1000 = vcmask 523264
    %v1002 = vsel %vm1000, %v786, 0
    %1004 = vmatprep.subr.bf16.mxu0 %v945
    %1005 = vmatpush1.bf16.msra.mxu0 %v944
    %1006 = vmatprep.subr.bf16.mxu0 %v952
    %1007 = vmatpush1.bf16.msra.mxu0 %v951
    %1008 = vmatprep.subr.bf16.mxu0 %v959
    %1009 = vmatpush1.bf16.msra.mxu0 %v958
    %1010 = vmatprep.subr.bf16.mxu0 %v966
    %1011 = vmatpush1.bf16.msra.mxu0 %v965
    %1012 = vmatprep.subr.bf16.mxu0 0
    %1013 = vmatpush1.bf16.msra.mxu0 0
    %1014 = vmatprep.subr.bf16.mxu0 0
    %1015 = vmatpush1.bf16.msra.mxu0 0
    %1016 = vmatprep.subr.bf16.mxu0 0
    %1017 = vmatpush1.bf16.msra.mxu0 0
    %1018 = vmatprep.subr.bf16.mxu0 0
    %1019 = vmatpush1.bf16.msra.mxu0 0
    %1020 = vmatprep.subr.bf16.mxu0 0
    %1021 = vmatpush1.bf16.msra.mxu0 0
    %1022 = vmatprep.subr.bf16.mxu0 0
    %1023 = vmatpush1.bf16.msra.mxu0 0
    %1024 = vmatprep.subr.bf16.mxu0 0
    %1025 = vmatpush1.bf16.msra.mxu0 0
    %1026 = vmatprep.subr.bf16.mxu0 0
    %1027 = vmatpush1.bf16.msra.mxu0 0
    %1028 = vmatprep.subr.bf16.mxu0 0
    %1029 = vmatpush1.bf16.msra.mxu0 0
    %1030 = vmatprep.subr.bf16.mxu0 0
    %1031 = vmatpush1.bf16.msra.mxu0 0
    %1032 = vmatprep.subr.bf16.mxu0 0
    %1033 = vmatpush1.bf16.msra.mxu0 0
    %1034 = vmatprep.subr.bf16.mxu0 0
    %1035 = vmatpush1.bf16.msra.mxu0 0
    %1036 = vmatprep.mubr.bf16.mxu0 0
    %1037 = vmatmul.mubr.bf16.gmra.mrb[0].mxu0 %v1002
    %v1038 = vpop.f32.mrb[0].mxu0
    %v1039 = vadd.f32 %v824, %v1038
    %v1040 = vpop.f32.mrb[0].mxu0
    %v1041 = vadd.f32 %v828, %v1040
    %v1042 = vpop.f32.mrb[0].mxu0
    %v1043 = vadd.f32 %v824, %v1042
    %v1044 = vpop.f32.mrb[0].mxu0
    %v1045 = vadd.f32 %v828, %v1044
    %1046 = vdwg.mxu0
    %1047 = vmatprep.subr.bf16.mxu0 %v947
    %1048 = vmatpush1.bf16.msra.mxu0 %v946
    %1049 = vmatprep.subr.bf16.mxu0 %v954
    %1050 = vmatpush1.bf16.msra.mxu0 %v953
    %1051 = vmatprep.subr.bf16.mxu0 %v961
    %1052 = vmatpush1.bf16.msra.mxu0 %v960
    %1053 = vmatprep.subr.bf16.mxu0 %v968
    %1054 = vmatpush1.bf16.msra.mxu0 %v967
    %1055 = vmatprep.subr.bf16.mxu0 0
    %1056 = vmatpush1.bf16.msra.mxu0 0
    %1057 = vmatprep.subr.bf16.mxu0 0
    %1058 = vmatpush1.bf16.msra.mxu0 0
    %1059 = vmatprep.subr.bf16.mxu0 0
    %1060 = vmatpush1.bf16.msra.mxu0 0
    %1061 = vmatprep.subr.bf16.mxu0 0
    %1062 = vmatpush1.bf16.msra.mxu0 0
    %1063 = vmatprep.subr.bf16.mxu0 0
    %1064 = vmatpush1.bf16.msra.mxu0 0
    %1065 = vmatprep.subr.bf16.mxu0 0
    %1066 = vmatpush1.bf16.msra.mxu0 0
    %1067 = vmatprep.subr.bf16.mxu0 0
    %1068 = vmatpush1.bf16.msra.mxu0 0
    %1069 = vmatprep.subr.bf16.mxu0 0
    %1070 = vmatpush1.bf16.msra.mxu0 0
    %1071 = vmatprep.subr.bf16.mxu0 0
    %1072 = vmatpush1.bf16.msra.mxu0 0
    %1073 = vmatprep.subr.bf16.mxu0 0
    %1074 = vmatpush1.bf16.msra.mxu0 0
    %1075 = vmatprep.subr.bf16.mxu0 0
    %1076 = vmatpush1.bf16.msra.mxu0 0
    %1077 = vmatprep.subr.bf16.mxu0 0
    %1078 = vmatpush1.bf16.msra.mxu0 0
    %1079 = vmatprep.mubr.bf16.mxu0 0
    %1080 = vmatmul.mubr.bf16.gmra.mrb[0].mxu0 %v1002
    %v1081 = vpop.f32.mrb[0].mxu0
    %v1082 = vadd.f32 %v832, %v1081
    %v1083 = vpop.f32.mrb[0].mxu0
    %v1084 = vadd.f32 %v836, %v1083
    %v1085 = vpop.f32.mrb[0].mxu0
    %v1086 = vadd.f32 %v832, %v1085
    %v1087 = vpop.f32.mrb[0].mxu0
    %v1088 = vadd.f32 %v836, %v1087
    %1089 = vdwg.mxu0
    %1090 = vmatprep.subr.bf16.mxu0 %v949
    %1091 = vmatpush1.bf16.msra.mxu0 %v948
    %1092 = vmatprep.subr.bf16.mxu0 %v956
    %1093 = vmatpush1.bf16.msra.mxu0 %v955
    %1094 = vmatprep.subr.bf16.mxu0 %v963
    %1095 = vmatpush1.bf16.msra.mxu0 %v962
    %1096 = vmatprep.subr.bf16.mxu0 %v970
    %1097 = vmatpush1.bf16.msra.mxu0 %v969
    %1098 = vmatprep.subr.bf16.mxu0 0
    %1099 = vmatpush1.bf16.msra.mxu0 0
    %1100 = vmatprep.subr.bf16.mxu0 0
    %1101 = vmatpush1.bf16.msra.mxu0 0
    %1102 = vmatprep.subr.bf16.mxu0 0
    %1103 = vmatpush1.bf16.msra.mxu0 0
    %1104 = vmatprep.subr.bf16.mxu0 0
    %1105 = vmatpush1.bf16.msra.mxu0 0
    %1106 = vmatprep.subr.bf16.mxu0 0
    %1107 = vmatpush1.bf16.msra.mxu0 0
    %1108 = vmatprep.subr.bf16.mxu0 0
    %1109 = vmatpush1.bf16.msra.mxu0 0
    %1110 = vmatprep.subr.bf16.mxu0 0
    %1111 = vmatpush1.bf16.msra.mxu0 0
    %1112 = vmatprep.subr.bf16.mxu0 0
    %1113 = vmatpush1.bf16.msra.mxu0 0
    %1114 = vmatprep.subr.bf16.mxu0 0
    %1115 = vmatpush1.bf16.msra.mxu0 0
    %1116 = vmatprep.subr.bf16.mxu0 0
    %1117 = vmatpush1.bf16.msra.mxu0 0
    %1118 = vmatprep.subr.bf16.mxu0 0
    %1119 = vmatpush1.bf16.msra.mxu0 0
    %1120 = vmatprep.subr.bf16.mxu0 0
    %1121 = vmatpush1.bf16.msra.mxu0 0
    %1122 = vmatprep.mubr.bf16.mxu0 0
    %1123 = vmatmul.mubr.bf16.gmra.mrb[0].mxu0 %v1002
    %v1124 = vpop.f32.mrb[0].mxu0
    %v1125 = vadd.f32 %v840, %v1124
    %v1126 = vpop.f32.mrb[0].mxu0
    %v1127 = vadd.f32 %v844, %v1126
    %v1128 = vpop.f32.mrb[0].mxu0
    %v1129 = vadd.f32 %v840, %v1128
    %v1130 = vpop.f32.mrb[0].mxu0
    %v1131 = vadd.f32 %v844, %v1130
    %1132 = vdwg.mxu0
    %1133 = vmatprep.subr.bf16.mxu0 0
    %1134 = vmatpush1.bf16.msra.mxu0 %v950
    %1135 = vmatprep.subr.bf16.mxu0 0
    %1136 = vmatpush1.bf16.msra.mxu0 %v957
    %1137 = vmatprep.subr.bf16.mxu0 0
    %1138 = vmatpush1.bf16.msra.mxu0 %v964
    %1139 = vmatprep.subr.bf16.mxu0 0
    %1140 = vmatpush1.bf16.msra.mxu0 %v971
    %1141 = vmatprep.subr.bf16.mxu0 0
    %1142 = vmatpush1.bf16.msra.mxu0 0
    %1143 = vmatprep.subr.bf16.mxu0 0
    %1144 = vmatpush1.bf16.msra.mxu0 0
    %1145 = vmatprep.subr.bf16.mxu0 0
    %1146 = vmatpush1.bf16.msra.mxu0 0
    %1147 = vmatprep.subr.bf16.mxu0 0
    %1148 = vmatpush1.bf16.msra.mxu0 0
    %1149 = vmatprep.subr.bf16.mxu0 0
    %1150 = vmatpush1.bf16.msra.mxu0 0
    %1151 = vmatprep.subr.bf16.mxu0 0
    %1152 = vmatpush1.bf16.msra.mxu0 0
    %1153 = vmatprep.subr.bf16.mxu0 0
    %1154 = vmatpush1.bf16.msra.mxu0 0
    %1155 = vmatprep.subr.bf16.mxu0 0
    %1156 = vmatpush1.bf16.msra.mxu0 0
    %1157 = vmatprep.subr.bf16.mxu0 0
    %1158 = vmatpush1.bf16.msra.mxu0 0
    %1159 = vmatprep.subr.bf16.mxu0 0
    %1160 = vmatpush1.bf16.msra.mxu0 0
    %1161 = vmatprep.subr.bf16.mxu0 0
    %1162 = vmatpush1.bf16.msra.mxu0 0
    %1163 = vmatprep.subr.bf16.mxu0 0
    %1164 = vmatpush1.bf16.msra.mxu0 0
    %1165 = vmatprep.mubr.bf16.mxu0 0
    %1166 = vmatmul.mubr.bf16.gmra.mrb[0].mxu0 %v1002
    %v1167 = vpop.f32.mrb[0].mxu0
    %v1168 = vadd.f32 %v848, %v1167
    %v1169 = vpop.f32.mrb[0].mxu0
    %v1170 = vpop.f32.mrb[0].mxu0
    %v1171 = vadd.f32 %v848, %v1170
    %v1172 = vpop.f32.mrb[0].mxu0
    %1173 = vdwg.mxu0
    %v1174 = vxor.u32 %v1039, 2147483648
    %v1175 = vxor.u32 %v1041, 2147483648
    %v1176 = vxor.u32 %v1082, 2147483648
    %v1177 = vxor.u32 %v1084, 2147483648
    %v1178 = vxor.u32 %v1125, 2147483648
    %v1179 = vxor.u32 %v1127, 2147483648
    %v1180 = vxor.u32 %v1168, 2147483648
    %v1181 = vxor.u32 %v1043, 2147483648
    %v1182 = vxor.u32 %v1045, 2147483648
    %v1183 = vxor.u32 %v1086, 2147483648
    %v1184 = vxor.u32 %v1088, 2147483648
    %v1185 = vxor.u32 %v1129, 2147483648
    %v1186 = vxor.u32 %v1131, 2147483648
    %v1187 = vxor.u32 %v1171, 2147483648
    %v1188 = vmul.f32 %v1174, 1.442695
    %v1189 = vpow.pop %v1188
    %v1190 = vmul.f32 %v1175, 1.442695
    %v1191 = vpow.pop %v1190
    %v1192 = vmul.f32 %v1176, 1.442695
    %v1193 = vpow.pop %v1192
    %v1194 = vmul.f32 %v1177, 1.442695
    %v1195 = vpow.pop %v1194
    %v1196 = vmul.f32 %v1178, 1.442695
    %v1197 = vpow.pop %v1196
    %v1198 = vmul.f32 %v1179, 1.442695
    %v1199 = vpow.pop %v1198
    %v1200 = vmul.f32 %v1180, 1.442695
    %v1201 = vpow.pop %v1200
    %v1202 = vmul.f32 %v1181, 1.442695
    %v1203 = vpow.pop %v1202
    %v1204 = vmul.f32 %v1182, 1.442695
    %v1205 = vpow.pop %v1204
    %v1206 = vmul.f32 %v1183, 1.442695
    %v1207 = vpow.pop %v1206
    %v1208 = vmul.f32 %v1184, 1.442695
    %v1209 = vpow.pop %v1208
    %v1210 = vmul.f32 %v1185, 1.442695
    %v1211 = vpow.pop %v1210
    %v1212 = vmul.f32 %v1186, 1.442695
    %v1213 = vpow.pop %v1212
    %v1214 = vmul.f32 %v1187, 1.442695
    %v1215 = vpow.pop %v1214
    %v1216 = vadd.f32 %v1189, 1.0
    %v1217 = vadd.f32 %v1191, 1.0
    %v1218 = vadd.f32 %v1193, 1.0
    %v1219 = vadd.f32 %v1195, 1.0
    %v1220 = vadd.f32 %v1197, 1.0
    %v1221 = vadd.f32 %v1199, 1.0
    %v1222 = vadd.f32 %v1201, 1.0
    %v1223 = vadd.f32 %v1203, 1.0
    %v1224 = vadd.f32 %v1205, 1.0
    %v1225 = vadd.f32 %v1207, 1.0
    %v1226 = vadd.f32 %v1209, 1.0
    %v1227 = vadd.f32 %v1211, 1.0
    %v1228 = vadd.f32 %v1213, 1.0
    %v1229 = vadd.f32 %v1215, 1.0
    %v1230 = vrcp.pop %v1216
    %v1231 = vmul.f32 1.0, %v1230
    %v1232 = vrcp.pop %v1217
    %v1233 = vmul.f32 1.0, %v1232
    %v1234 = vrcp.pop %v1218
    %v1235 = vmul.f32 1.0, %v1234
    %v1236 = vrcp.pop %v1219
    %v1237 = vmul.f32 1.0, %v1236
    %v1238 = vrcp.pop %v1220
    %v1239 = vmul.f32 1.0, %v1238
    %v1240 = vrcp.pop %v1221
    %v1241 = vmul.f32 1.0, %v1240
    %v1242 = vrcp.pop %v1222
    %v1243 = vmul.f32 1.0, %v1242
    %v1244 = vrcp.pop %v1223
    %v1245 = vmul.f32 1.0, %v1244
    %v1246 = vrcp.pop %v1224
    %v1247 = vmul.f32 1.0, %v1246
    %v1248 = vrcp.pop %v1225
    %v1249 = vmul.f32 1.0, %v1248
    %v1250 = vrcp.pop %v1226
    %v1251 = vmul.f32 1.0, %v1250
    %v1252 = vrcp.pop %v1227
    %v1253 = vmul.f32 1.0, %v1252
    %v1254 = vrcp.pop %v1228
    %v1255 = vmul.f32 1.0, %v1254
    %v1256 = vrcp.pop %v1229
    %v1257 = vmul.f32 1.0, %v1256
    %v1258 = vpack.c.bf16 %v1245, %v1231
    %v1259 = vpack.c.bf16 %v1247, %v1233
    %v1260 = vpack.c.bf16 %v1249, %v1235
    %v1261 = vpack.c.bf16 %v1251, %v1237
    %v1262 = vpack.c.bf16 %v1253, %v1239
    %v1263 = vpack.c.bf16 %v1255, %v1241
    %v1264 = vpack.c.bf16 %v1257, %v1243
    %v1272 = vcombine.low %v1258, %v1259
    %v1273 = vcombine.high %v1258, %v1259
    %v1274 = vcombine.low %v1260, %v1261
    %v1275 = vcombine.high %v1260, %v1261
    %v1276 = vcombine.low %v1262, %v1263
    %v1277 = vcombine.high %v1262, %v1263
    %v1278 = vcombine.high %v1264, %v1264
    %v1280 = vunpack.c.l.s4 1966171168
    %v1281 = vunpack.c.0.s8 %v1280
    %v1282 = vlaneseq
    %v1283 = vshrl.u32 %v1282, 7
    %v1284 = vsub.s32 %v1281, %v1283
    %v1285 = vrot.slane %v1272, %v1284
    %v1287 = vunpack.c.l.s4 1966171168
    %v1288 = vunpack.c.0.s8 %v1287
    %v1289 = vlaneseq
    %v1290 = vshrl.u32 %v1289, 7
    %v1291 = vsub.s32 %v1288, %v1290
    %v1292 = vrot.slane %v1273, %v1291
    %v1294 = vunpack.c.l.s4 1966171168
    %v1295 = vunpack.c.0.s8 %v1294
    %v1296 = vlaneseq
    %v1297 = vshrl.u32 %v1296, 7
    %v1298 = vsub.s32 %v1295, %v1297
    %v1299 = vrot.slane %v1274, %v1298
    %v1301 = vunpack.c.l.s4 1966171168
    %v1302 = vunpack.c.0.s8 %v1301
    %v1303 = vlaneseq
    %v1304 = vshrl.u32 %v1303, 7
    %v1305 = vsub.s32 %v1302, %v1304
    %v1306 = vrot.slane %v1275, %v1305
    %v1308 = vunpack.c.l.s4 1966171168
    %v1309 = vunpack.c.0.s8 %v1308
    %v1310 = vlaneseq
    %v1311 = vshrl.u32 %v1310, 7
    %v1312 = vsub.s32 %v1309, %v1311
    %v1313 = vrot.slane %v1276, %v1312
    %v1315 = vunpack.c.l.s4 1966171168
    %v1316 = vunpack.c.0.s8 %v1315
    %v1317 = vlaneseq
    %v1318 = vshrl.u32 %v1317, 7
    %v1319 = vsub.s32 %v1316, %v1318
    %v1320 = vrot.slane %v1277, %v1319
    %v1322 = vunpack.c.l.s4 1966171168
    %v1323 = vunpack.c.0.s8 %v1322
    %v1324 = vlaneseq
    %v1325 = vshrl.u32 %v1324, 7
    %v1326 = vsub.s32 %v1323, %v1325
    %v1327 = vrot.slane %v1264, %v1326
    %v1329 = vunpack.c.l.s4 1966171168
    %v1330 = vunpack.c.0.s8 %v1329
    %v1331 = vlaneseq
    %v1332 = vshrl.u32 %v1331, 7
    %v1333 = vsub.s32 %v1330, %v1332
    %v1334 = vrot.slane %v1278, %v1333
    %v1335 = vcombine.low %v1285, %v1299
    %v1336 = vcombine.high %v1285, %v1299
    %v1337 = vcombine.low %v1292, %v1306
    %v1338 = vcombine.high %v1292, %v1306
    %v1339 = vcombine.low %v1313, %v1327
    %v1340 = vcombine.high %v1313, %v1327
    %v1341 = vcombine.low %v1320, %v1334
    %v1342 = vcombine.high %v1320, %v1334
    %v1344 = vunpack.c.l.s4 1966171168
    %v1345 = vunpack.c.0.s8 %v1344
    %v1346 = vlaneseq
    %v1347 = vshrl.u32 %v1346, 7
    %v1348 = vsub.s32 %v1345, %v1347
    %v1349 = vrot.slane %v1335, %v1348
    %v1351 = vunpack.c.l.s4 1966171168
    %v1352 = vunpack.c.0.s8 %v1351
    %v1353 = vlaneseq
    %v1354 = vshrl.u32 %v1353, 7
    %v1355 = vsub.s32 %v1352, %v1354
    %v1356 = vrot.slane %v1337, %v1355
    %v1358 = vunpack.c.l.s4 1966171168
    %v1359 = vunpack.c.0.s8 %v1358
    %v1360 = vlaneseq
    %v1361 = vshrl.u32 %v1360, 7
    %v1362 = vsub.s32 %v1359, %v1361
    %v1363 = vrot.slane %v1336, %v1362
    %v1365 = vunpack.c.l.s4 1966171168
    %v1366 = vunpack.c.0.s8 %v1365
    %v1367 = vlaneseq
    %v1368 = vshrl.u32 %v1367, 7
    %v1369 = vsub.s32 %v1366, %v1368
    %v1370 = vrot.slane %v1338, %v1369
    %v1372 = vunpack.c.l.s4 1966171168
    %v1373 = vunpack.c.0.s8 %v1372
    %v1374 = vlaneseq
    %v1375 = vshrl.u32 %v1374, 7
    %v1376 = vsub.s32 %v1373, %v1375
    %v1377 = vrot.slane %v1339, %v1376
    %v1379 = vunpack.c.l.s4 1966171168
    %v1380 = vunpack.c.0.s8 %v1379
    %v1381 = vlaneseq
    %v1382 = vshrl.u32 %v1381, 7
    %v1383 = vsub.s32 %v1380, %v1382
    %v1384 = vrot.slane %v1341, %v1383
    %v1386 = vunpack.c.l.s4 1966171168
    %v1387 = vunpack.c.0.s8 %v1386
    %v1388 = vlaneseq
    %v1389 = vshrl.u32 %v1388, 7
    %v1390 = vsub.s32 %v1387, %v1389
    %v1391 = vrot.slane %v1340, %v1390
    %v1393 = vunpack.c.l.s4 1966171168
    %v1394 = vunpack.c.0.s8 %v1393
    %v1395 = vlaneseq
    %v1396 = vshrl.u32 %v1395, 7
    %v1397 = vsub.s32 %v1394, %v1396
    %v1398 = vrot.slane %v1342, %v1397
    %v1399 = vcombine.low %v1349, %v1377
    %v1400 = vcombine.high %v1349, %v1377
    %v1401 = vcombine.low %v1356, %v1384
    %v1402 = vcombine.high %v1356, %v1384
    %v1403 = vcombine.low %v1363, %v1391
    %v1404 = vcombine.high %v1363, %v1391
    %v1405 = vcombine.low %v1370, %v1398
    %v1406 = vcombine.high %v1370, %v1398
    %vm1415 = vcmask 1040384
    %vm1416 = vcmask 1041409
    %vm1417 = vmor %vm1416, %vm1415
    %vm1418 = vcmask 1042434
    %vm1419 = vmor %vm1418, %vm1417
    %vm1420 = vcmask 1043459
    %vm1421 = vmor %vm1420, %vm1419
    %vm1422 = vcmask 1044484
    %vm1423 = vmor %vm1422, %vm1421
    %vm1424 = vcmask 1045509
    %vm1425 = vmor %vm1424, %vm1423
    %vm1426 = vcmask 129030
    %vm1427 = vmor %vm1426, %vm1425
    %1428 = vst.msk [vmem:[#allocation2] sm:$0x7f] %vm1427, %v1399
    %1429 = vst.msk [vmem:[#allocation2 + $0x7] sm:$0x7f] %vm1427, %v1403
    %1430 = vst.msk [vmem:[#allocation2 + $0xe] sm:$0x7f] %vm1427, %v1400
    %1431 = vst.msk [vmem:[#allocation2 + $0x15] sm:$0x7f] %vm1427, %v1404
    %1432 = vst.msk [vmem:[#allocation2 + $0x1c] sm:$0x7f] %vm1427, %v1401
    %1433 = vst.msk [vmem:[#allocation2 + $0x23] sm:$0x7f] %vm1427, %v1405
    %1434 = vst.msk [vmem:[#allocation2 + $0x2a] sm:$0x7f] %vm1427, %v1402
    %1435 = vst.msk [vmem:[#allocation2 + $0x31] sm:$0x7f] %vm1427, %v1406
    // Predicated region
    $region22: #{tpu_custom_call.1} parent=1 // pred_check
      _
    $region23: #{tpu_custom_call.1} parent=1 // pred_check_branch
      %1437 = sbr.rel (0) target = $region25
    $region24: #{tpu_custom_call.1} parent=1 // pred_region
      %s1439 = ssub.s32 896, 112
      %1440 = vsyncadd [#allocation3], %s1439
      %s1441 = sshll.u32 [#allocation2], 4
      %s1442 = int_to_ptr.vmem [resolvable:$true] %s1441
      %1447 = dma.vmem_to_hbm [thread:$0]  %s1442, 112, %s5, [#allocation3], 112, 112, 7
    $region25: #{tpu_custom_call.1} parent=1 // pred_fallthru
      _
    // Predicated region
    $region26: #{tpu_custom_call.1} parent=1 // pred_check
      _
    $region27: #{tpu_custom_call.1} parent=1 // pred_check_branch
      %1449 = sbr.rel (0) target = $region29
    $region28: #{tpu_custom_call.1} parent=1 // pred_region
      %1450 = dma.done [#allocation3], 896
    $region29: #{tpu_custom_call.1} parent=1 // pred_fallthru
      _
    %1451 = vsyncpa [#allocation3], 1

</llo_original>
